<compile_context>
chip_gen: v5e
topology: v5e:2x2
jax: 0.10.0
libtpu: 0.0.40
codegen_flags: <defaults>
</compile_context>

<pallas_src>
import jax
import jax.numpy as jnp
from jax import lax
from jax.experimental import pallas as pl
from jax.experimental.pallas import tpu as pltpu

LANES = 128
SUBLANES = 8


def _device_tuning():
    """(max_row_tile, num_core_splits) for the current TPU generation."""
    row_tile = 4096      # 2 MiB f32 / input block; 8 MiB double-buffered (v5e-safe)
    splits = 1
    try:
        kind = jax.devices()[0].device_kind.lower()
    except Exception:    # no devices / unknown backend -> conservative defaults
        return row_tile, splits
    if "v6" in kind:
        row_tile = 8192  # 4 MiB/block; 16 MiB buffered <= 32 MiB scoped default
    if "v7" in kind:
        row_tile = 8192  # 64 MiB physical VMEM; 16 MiB buffered is safe
        splits = 2       # 2 TensorCores per chip: shard the streaming reduction
    return row_tile, splits


def _make_mse_kernel(row_tile, full_rows, blocks_per_split):
    chunks = row_tile // SUBLANES

    def kernel(p_ref, g_ref, o_ref):
        c = pl.program_id(0)          # core split (parallel)
        j = pl.program_id(1)          # reduction step (arbitrary)

        @pl.when(j == 0)
        def _():
            o_ref[...] = jnp.zeros_like(o_ref)

        # Logical (unclamped) first row of this grid step.  Rows >= full_rows
        # are masked, which also zeroes the clamped duplicate block that an odd
        # block count can assign to the last (core, step).
        row0 = (c * blocks_per_split + j) * row_tile
        base_rows = lax.broadcasted_iota(jnp.int32, (SUBLANES, LANES), 0)

        def body(k, acc):
            r = pl.multiple_of(k * SUBLANES, SUBLANES)
            p = p_ref[pl.ds(r, SUBLANES), :]
            g = g_ref[pl.ds(r, SUBLANES), :]
            d = p - g
            sq = d * d
            valid = (base_rows + (row0 + r)) < full_rows
            return acc + jnp.where(valid, sq, 0.0)

        acc = lax.fori_loop(0, chunks, body,
                            jnp.zeros((SUBLANES, LANES), jnp.float32),
                            unroll=min(8, chunks))
        o_ref[...] += acc

    return kernel


def _mse_partial_sums(p2d, g2d, max_row_tile, num_splits):
    full_rows = p2d.shape[0]
    row_tile = min(max_row_tile, (full_rows // SUBLANES) * SUBLANES)
    total_blocks = pl.cdiv(full_rows, row_tile)
    num_splits = max(1, min(num_splits, total_blocks))
    blocks_per_split = pl.cdiv(total_blocks, num_splits)

    def in_index_map(c, j):
        b = c * blocks_per_split + j
        # Keep the DMA in-bounds; the kernel's row mask zeroes any duplicate.
        return (jnp.minimum(b, total_blocks - 1), 0)

    kernel = _make_mse_kernel(row_tile, full_rows, blocks_per_split)
    in_bytes = p2d.size * p2d.dtype.itemsize + g2d.size * g2d.dtype.itemsize
    out_rows = num_splits * SUBLANES

    return pl.pallas_call(
        kernel,
        out_shape=jax.ShapeDtypeStruct((out_rows, LANES), jnp.float32),
        grid_spec=pltpu.PrefetchScalarGridSpec(
            num_scalar_prefetch=0,
            grid=(num_splits, blocks_per_split),
            in_specs=[
                pl.BlockSpec((row_tile, LANES), in_index_map),
                pl.BlockSpec((row_tile, LANES), in_index_map),
            ],
            # Each core split owns one resident (8,128) accumulator block across
            # the 'arbitrary' reduction axis.
            out_specs=pl.BlockSpec((SUBLANES, LANES), lambda c, j: (c, 0)),
        ),
        compiler_params=pltpu.CompilerParams(
            dimension_semantics=("parallel", "arbitrary"),
        ),
        cost_estimate=pl.CostEstimate(
            flops=3 * p2d.size,                     # sub, mul, add per element
            transcendentals=0,
            bytes_accessed=in_bytes + out_rows * LANES * 4,
        ),
    )(p2d, g2d)


@jax.jit
def mse_loss(predictions, ground_truth):
    assert predictions.shape == ground_truth.shape, "shapes must match"
    n = predictions.size
    if n == 0:
        # Matches torch.nn.functional.mse_loss on empty input (NaN).
        return jnp.float32(jnp.nan)

    # TODO(synk): handle bf16/fp16 natively ((16,128)/(32,128) min tiles) instead
    # of widening to f32 in the wrapper.
    p_flat = predictions.reshape(-1).astype(jnp.float32)
    g_flat = ground_truth.reshape(-1).astype(jnp.float32)

    full_rows = n // LANES
    tail = n - full_rows * LANES

    total = jnp.float32(0.0)

    if full_rows >= SUBLANES:
        max_row_tile, num_splits = _device_tuning()
        if tail == 0:
            # Common case: pure reshape, no copy, no extra HBM traffic.
            p2d = p_flat.reshape(full_rows, LANES)
            g2d = g_flat.reshape(full_rows, LANES)
        else:
            # TODO(synk): non-128-aligned n still pays one slice copy of the row
            # prefix; avoidable only with a manual-DMA (memory_space=pl.ANY) path.
            p2d = p_flat[: full_rows * LANES].reshape(full_rows, LANES)
            g2d = g_flat[: full_rows * LANES].reshape(full_rows, LANES)
        partials = _mse_partial_sums(p2d, g2d, max_row_tile, num_splits)
        # f32 lane-wise accumulation: each lane sums ~n/1024 terms; a few-ULP
        # drift vs a pairwise/f64 reference is possible only for n >~ 1e8.
        total = total + jnp.sum(partials, dtype=jnp.float32)
        start = full_rows * LANES
    else:
        start = 0   # tiny input (< 1024 elements): plain JAX only

    if start < n:
        dt = p_flat[start:] - g_flat[start:]     # always < 128 elements
        total = total + jnp.sum(dt * dt, dtype=jnp.float32)

    return total / jnp.float32(n)


if __name__ == "__main__":
    key = jax.random.PRNGKey(0)
    kp, kg = jax.random.split(key)

    # Small NCHW-like prediction / ground-truth pair (2048 elems, 128-aligned).
    shape = (2, 4, 16, 16)
    predictions = jax.random.normal(kp, shape, dtype=jnp.float32)
    ground_truth = jax.random.normal(kg, shape, dtype=jnp.float32)
    loss = mse_loss(predictions, ground_truth)
    jax.block_until_ready(loss)
    ref = jnp.mean((predictions - ground_truth) ** 2)
    assert jnp.allclose(loss, ref, rtol=1e-6, atol=1e-6), (loss, ref)

    # 128-aligned but not block-aligned: 4*4*32*33 = 16896 elems = 132 rows
    # -> 2 grid blocks, last block partially masked, zero slice copies.
    shape2 = (4, 4, 32, 33)
    kp2, kg2 = jax.random.split(kg)
    p2 = jax.random.normal(kp2, shape2, dtype=jnp.float32)
    g2 = jax.random.normal(kg2, shape2, dtype=jnp.float32)
    loss2 = mse_loss(p2, g2)
    jax.block_until_ready(loss2)
    ref2 = jnp.mean((p2 - g2) ** 2)
    assert jnp.allclose(loss2, ref2, rtol=1e-6, atol=1e-6), (loss2, ref2)

    # Non-128-aligned: 3*5*7*11 = 1155 -> 9 in-kernel rows + 3-element JAX tail.
    shape3 = (3, 5, 7, 11)
    kp3, kg3 = jax.random.split(kg2)
    p3 = jax.random.normal(kp3, shape3, dtype=jnp.float32)
    g3 = jax.random.normal(kg3, shape3, dtype=jnp.float32)
    loss3 = mse_loss(p3, g3)
    jax.block_until_ready(loss3)
    ref3 = jnp.mean((p3 - g3) ** 2)
    assert jnp.allclose(loss3, ref3, rtol=1e-6, atol=1e-6), (loss3, ref3)

    print("KERNEL_OK")
</pallas_src>

<mosaic_0001>
module attributes {stable_mosaic.version = 11 : i64} {
  func.func @kernel(%arg0: i32, %arg1: i32, %arg2: memref<16x128xf32, #tpu.memory_space<vmem>>, %arg3: memref<16x128xf32, #tpu.memory_space<vmem>>, %arg4: memref<8x128xf32, #tpu.memory_space<vmem>>) attributes {dimension_semantics = [#tpu.dimension_semantics<parallel>, #tpu.dimension_semantics<arbitrary>], iteration_bounds = array<i64: 1, 1>, scalar_prefetch = 0 : i64, scratch_operands = 0 : i64, tpu.core_type = #tpu.core_type<tc>, window_params = [{transform_indices = @transform_0, window_bounds = array<i64: 16, 128>}, {transform_indices = @transform_1, window_bounds = array<i64: 16, 128>}, {transform_indices = @transform_2, window_bounds = array<i64: 8, 128>}]} {
    %c0_i32 = arith.constant 0 : i32
    %0 = arith.cmpi eq, %arg1, %c0_i32 : i32
    %1 = arith.extui %0 : i1 to i32
    %c0_i32_0 = arith.constant 0 : i32
    %2 = arith.cmpi ne, %1, %c0_i32_0 : i32
    scf.if %2 {
      %cst_15 = arith.constant 0.000000e+00 : f32
      %43 = vector.broadcast %cst_15 : f32 to vector<8x128xf32>
      %c0_16 = arith.constant 0 : index
      %c0_17 = arith.constant 0 : index
      %44 = vector.load %arg4[%c0_16, %c0_17] : memref<8x128xf32, #tpu.memory_space<vmem>>, vector<8x128xf32>
      tpu.vector_store %arg4[%c0_16, %c0_17], %43 {strides = array<i32>} : memref<8x128xf32, #tpu.memory_space<vmem>>, vector<8x128xf32>,
    } else {
    }
    %c1_i32 = arith.constant 1 : i32
    %3 = arith.muli %arg0, %c1_i32 : i32
    %4 = arith.addi %3, %arg1 : i32
    %c16_i32 = arith.constant 16 : i32
    %5 = arith.muli %4, %c16_i32 : i32
    %6 = tpu.iota {dimensions = array<i32: 0>} : vector<8x128xi32>
    %cst = arith.constant 0.000000e+00 : f32
    %7 = vector.broadcast %cst : f32 to vector<8x128xf32>
    %c0_i32_1 = arith.constant 0 : i32
    %c8_i32 = arith.constant 8 : i32
    %8 = arith.muli %c0_i32_1, %c8_i32 : i32
    %9 = tpu.assume_multiple %8, 8 : i32
    %10 = arith.index_cast %9 : i32 to index
    %c0 = arith.constant 0 : index
    %11 = vector.load %arg2[%10, %c0] : memref<16x128xf32, #tpu.memory_space<vmem>>, vector<8x128xf32>
    %12 = arith.index_cast %9 : i32 to index
    %c0_2 = arith.constant 0 : index
    %13 = vector.load %arg3[%12, %c0_2] : memref<16x128xf32, #tpu.memory_space<vmem>>, vector<8x128xf32>
    %14 = arith.subf %11, %13 : vector<8x128xf32>
    %15 = arith.mulf %14, %14 : vector<8x128xf32>
    %16 = arith.addi %5, %9 : i32
    %17 = vector.broadcast %16 : i32 to vector<8x128xi32>
    %18 = arith.addi %6, %17 : vector<8x128xi32>
    %c16_i32_3 = arith.constant 16 : i32
    %19 = vector.broadcast %c16_i32_3 : i32 to vector<8x128xi32>
    %20 = arith.cmpi slt, %18, %19 : vector<8x128xi32>
    %cst_4 = arith.constant 0.000000e+00 : f32
    %21 = vector.broadcast %cst_4 : f32 to vector<8x128xf32>
    %22 = arith.select %20, %15, %21 : vector<8x128xi1>, vector<8x128xf32>
    %23 = arith.addf %7, %22 : vector<8x128xf32>
    %c1_i32_5 = arith.constant 1 : i32
    %c8_i32_6 = arith.constant 8 : i32
    %24 = arith.muli %c1_i32_5, %c8_i32_6 : i32
    %25 = tpu.assume_multiple %24, 8 : i32
    %26 = arith.index_cast %25 : i32 to index
    %c0_7 = arith.constant 0 : index
    %27 = vector.load %arg2[%26, %c0_7] : memref<16x128xf32, #tpu.memory_space<vmem>>, vector<8x128xf32>
    %28 = arith.index_cast %25 : i32 to index
    %c0_8 = arith.constant 0 : index
    %29 = vector.load %arg3[%28, %c0_8] : memref<16x128xf32, #tpu.memory_space<vmem>>, vector<8x128xf32>
    %30 = arith.subf %27, %29 : vector<8x128xf32>
    %31 = arith.mulf %30, %30 : vector<8x128xf32>
    %32 = arith.addi %5, %25 : i32
    %33 = vector.broadcast %32 : i32 to vector<8x128xi32>
    %34 = arith.addi %6, %33 : vector<8x128xi32>
    %c16_i32_9 = arith.constant 16 : i32
    %35 = vector.broadcast %c16_i32_9 : i32 to vector<8x128xi32>
    %36 = arith.cmpi slt, %34, %35 : vector<8x128xi32>
    %cst_10 = arith.constant 0.000000e+00 : f32
    %37 = vector.broadcast %cst_10 : f32 to vector<8x128xf32>
    %38 = arith.select %36, %31, %37 : vector<8x128xi1>, vector<8x128xf32>
    %39 = arith.addf %23, %38 : vector<8x128xf32>
    %c2_i32 = arith.constant 2 : i32
    %c0_11 = arith.constant 0 : index
    %c0_12 = arith.constant 0 : index
    %40 = vector.load %arg4[%c0_11, %c0_12] : memref<8x128xf32, #tpu.memory_space<vmem>>, vector<8x128xf32>
    %41 = arith.addf %40, %39 : vector<8x128xf32>
    %c0_13 = arith.constant 0 : index
    %c0_14 = arith.constant 0 : index
    %42 = vector.load %arg4[%c0_13, %c0_14] : memref<8x128xf32, #tpu.memory_space<vmem>>, vector<8x128xf32>
    tpu.vector_store %arg4[%c0_13, %c0_14], %41 {strides = array<i32>} : memref<8x128xf32, #tpu.memory_space<vmem>>, vector<8x128xf32>,
    return
  }
  func.func @transform_0(%arg0: i32, %arg1: i32) -> (i32, i32) {
    %c1_i32 = arith.constant 1 : i32
    %0 = arith.muli %arg0, %c1_i32 : i32
    %1 = arith.addi %0, %arg1 : i32
    %c0_i32 = arith.constant 0 : i32
    %2 = arith.minsi %1, %c0_i32 : i32
    %c0_i32_0 = arith.constant 0 : i32
    %c0_i32_1 = arith.constant 0 : i32
    return %2, %c0_i32_0 : i32, i32
  }
  func.func @transform_1(%arg0: i32, %arg1: i32) -> (i32, i32) {
    %c1_i32 = arith.constant 1 : i32
    %0 = arith.muli %arg0, %c1_i32 : i32
    %1 = arith.addi %0, %arg1 : i32
    %c0_i32 = arith.constant 0 : i32
    %2 = arith.minsi %1, %c0_i32 : i32
    %c0_i32_0 = arith.constant 0 : i32
    %c0_i32_1 = arith.constant 0 : i32
    return %2, %c0_i32_0 : i32, i32
  }
  func.func @transform_2(%arg0: i32, %arg1: i32) -> (i32, i32) {
    %c0_i32 = arith.constant 0 : i32
    %c0_i32_0 = arith.constant 0 : i32
    return %arg0, %c0_i32 : i32, i32
  }
}

</mosaic_0001>

<llo_original>
// kernel: mse_loss.1
$region0: #{mse_loss.1}
  #allocation0 [shape = 'u32[]', space=smem, size = 0x4, offset = 0x4, fixed_abs, tag = 'smem constant byte address 0x4 - core index']
  #allocation1 [shape = 'u32[72,128]{1,0:T(1,128)}', space=vmem, size = 0x9000, scoped, tag = 'internal scratch']
  %s0 = inlined_call_operand.vmem [shape: f32[16,128], index: 0, kind: input, shape index: {}]
  %s1 = inlined_call_operand.vmem [shape: f32[16,128], index: 1, kind: input, shape index: {}]
  %s2 = inlined_call_operand.vmem [shape: f32[8,128], index: 2, kind: output, shape index: {}]
  %s3 = sld [smem:[#allocation0]]
  $region22: #{mse_loss.1} parent=0
    _
  %s5 = ssub.s32 1, %s3
  %s6 = scalar_select 0, %s5, %s3
  // Predicated region
  $region2: #{mse_loss.1} parent=0 // pred_check
    _
  $region3: #{mse_loss.1} parent=0 // pred_check_branch
    %8 = sbr.rel (0) target = $region5
  $region4: #{mse_loss.1} parent=0 // pred_region
    %s9 = sadd.s32 0, 0
    %p10 = scmp.lt.s32.totalorder %s9, 0
    %s11 = scalar_select %p10, %s9, 0
    %s12 = smul.u32 2, %s11
    %p13 = scmp.lt.s32.totalorder %s12, 1
    %s14 = scalar_select %p13, %s12, 1
    %s15 = smul.addr %s14, 8
    %s16 = scalar_lea.vmem %s0, %s15
    %s17 = sadd.s32 0, 0
    %p18 = scmp.lt.s32.totalorder %s17, 0
    %s19 = scalar_select %p18, %s17, 0
    %s20 = smul.u32 2, %s19
  $region5: #{mse_loss.1} parent=0 // pred_fallthru
    _
  // Predicated region
  $region6: #{mse_loss.1} parent=0 // pred_check
    _
  $region7: #{mse_loss.1} parent=0 // pred_check_branch
    %22 = sbr.rel (0) target = $region9
  $region8: #{mse_loss.1} parent=0 // pred_region
    %s23 = sadd.s32 0, 0
    %p24 = scmp.lt.s32.totalorder %s23, 0
    %s25 = scalar_select %p24, %s23, 0
    %s26 = smul.u32 2, %s25
    %p27 = scmp.lt.s32.totalorder %s26, 1
    %s28 = scalar_select %p27, %s26, 1
    %s29 = smul.addr %s28, 8
    %s30 = scalar_lea.vmem %s1, %s29
    %s31 = sadd.s32 0, 0
    %p32 = scmp.lt.s32.totalorder %s31, 0
    %s33 = scalar_select %p32, %s31, 0
    %s34 = smul.u32 2, %s33
  $region9: #{mse_loss.1} parent=0 // pred_fallthru
    _
  %s35 = sadd.s32 0, 0
  %p36 = scmp.lt.s32.totalorder %s35, 0
  %s37 = scalar_select %p36, %s35, 0
  %s38 = smul.u32 2, %s37
  %p39 = scmp.lt.s32.totalorder %s38, 1
  %s40 = scalar_select %p39, %s38, 1
  %s41 = smul.addr %s40, 8
  %s42 = scalar_lea.vmem %s0, %s41
  %s43 = sadd.s32 0, 0
  %p44 = scmp.lt.s32.totalorder %s43, 0
  %s45 = scalar_select %p44, %s43, 0
  %s46 = smul.u32 2, %s45
  %p47 = scmp.lt.s32.totalorder %s46, 1
  %s48 = scalar_select %p47, %s46, 1
  %s49 = smul.addr %s48, 8
  %s50 = scalar_lea.vmem %s1, %s49
  %s51 = sadd.s32 0, 0
  %p52 = scmp.lt.s32.totalorder %s51, 0
  %s53 = scalar_select %p52, %s51, 0
  %s54 = smul.u32 2, %s53
  %p55 = scmp.lt.s32.totalorder %s54, 1
  %s56 = scalar_select %p55, %s54, 1
  %s57 = smul.addr %s56, 8
  %s58 = scalar_lea.vmem %s0, %s57
  %s59 = sadd.s32 0, 0
  %p60 = scmp.lt.s32.totalorder %s59, 0
  %s61 = scalar_select %p60, %s59, 0
  %s62 = smul.u32 2, %s61
  %s63 = sadd.s32 0, 0
  %p64 = scmp.lt.s32.totalorder %s63, 0
  %s65 = scalar_select %p64, %s63, 0
  %s66 = smul.u32 2, %s65
  %p67 = scmp.lt.s32.totalorder %s66, 1
  %s68 = scalar_select %p67, %s66, 1
  %s69 = smul.addr %s68, 8
  %s70 = scalar_lea.vmem %s1, %s69
  %s71 = sadd.s32 0, 0
  %p72 = scmp.lt.s32.totalorder %s71, 0
  %s73 = scalar_select %p72, %s71, 0
  %s74 = smul.u32 2, %s73
  %p75 = scmp.eq.s32.totalorder 0, 0
  // Predicated region
  $region10: #{mse_loss.1} parent=0 // pred_check
    %p76 = pneg %p75
  $region11: #{mse_loss.1} parent=0 // pred_check_branch
    %78 = sbr.rel (%p76) target = $region13
  $region12: #{mse_loss.1} parent=0 // pred_region
    %79 = vst [vmem:[%s2] sm:$0xff] 0.0
  $region13: #{mse_loss.1} parent=0 // pred_fallthru
    _
  %s80 = sadd.s32 0, 0
  %s81 = smul.u32 %s80, 16
  %v82 = vlaneseq
  %v83 = vshrl.u32 %v82, 7
  %v84 = vld [vmem:[%s58] sm:$0xff]
  %v85 = vld [vmem:[%s70] sm:$0xff]
  %v86 = vsub.f32 %v84, %v85
  %v87 = vmul.f32 %v86, %v86
  %s88 = sadd.s32 %s81, 0
  %v89 = vstv %s88
  %v90 = vadd.s32 %v83, %v89
  %vm91 = vcmp.lt.s32.totalorder %v90, 16
  %v92 = vsel %vm91, %v87, 0.0
  %v93 = vadd.f32 %v92, 0.0
  %s94 = scalar_lea.vmem %s58, 8
  %v95 = vld [vmem:[%s94] sm:$0xff]
  %s96 = scalar_lea.vmem %s70, 8
  %v97 = vld [vmem:[%s96] sm:$0xff]
  %v98 = vsub.f32 %v95, %v97
  %v99 = vmul.f32 %v98, %v98
  %s100 = sadd.s32 %s81, 8
  %v101 = vstv %s100
  %v102 = vadd.s32 %v83, %v101
  %vm103 = vcmp.lt.s32.totalorder %v102, 16
  %v104 = vsel %vm103, %v99, 0.0
  %v105 = vadd.f32 %v93, %v104
  %v106 = vld [vmem:[%s2] sm:$0xff]
  %v107 = vadd.f32 %v106, %v105
  %108 = vst [vmem:[%s2] sm:$0xff] %v107
  // Predicated region
  $region14: #{mse_loss.1} parent=0 // pred_check
    _
  $region15: #{mse_loss.1} parent=0 // pred_check_branch
    %110 = sbr.rel (0) target = $region17
  $region16: #{mse_loss.1} parent=0 // pred_region
    _
  $region17: #{mse_loss.1} parent=0 // pred_fallthru
    _
  // Predicated region
  $region18: #{mse_loss.1} parent=0 // pred_check
    _
  $region19: #{mse_loss.1} parent=0 // pred_check_branch
    %112 = sbr.rel (0) target = $region21
  $region20: #{mse_loss.1} parent=0 // pred_region
    _
  $region21: #{mse_loss.1} parent=0 // pred_fallthru
    _

</llo_original>
